<compile_context>
chip_gen: v7x
topology: tpu7x:2x2x1
jax: 0.10.0
libtpu: 0.0.40
codegen_flags: <defaults>
</compile_context>

<pallas_src>
import numpy as np
import jax
import jax.numpy as jnp
from jax.experimental import pallas as pl
from jax.experimental.pallas import tpu as pltpu


def _silu(x):
    return x * jax.nn.sigmoid(x)


def _round_up(a, b):
    return (a + b - 1) // b * b


# --------------------------------------------------------------------------
# Pass 1: edge transform + scatter-sum (each edge tile read from HBM once).
# --------------------------------------------------------------------------
def scatter_kernel(idx_ref, rbf_ref, x_ref, w_rbf_ref, acc_ref, rows_ref):
    e = pl.program_id(0)

    @pl.when(e == 0)
    def _():
        acc_ref[...] = jnp.zeros_like(acc_ref)
        # Grid-invariant row-index matrix: materialize once, reuse each step.
        rows_ref[...] = jax.lax.broadcasted_iota(jnp.int32, rows_ref.shape, 0)

    # 1) lin_rbf(rbf) * x  -> [E_tile, H], computed once per edge tile.
    #    rbf/w_rbf stay f32 (tiny K); x arrives as bf16 and the product is
    #    rounded to bf16 for the scatter MXU matmul anyway.
    edge = (jnp.dot(rbf_ref[...], w_rbf_ref[...],
                    preferred_element_type=jnp.float32)
            * x_ref[...].astype(jnp.float32)).astype(jnp.bfloat16)

    # 2) scatter-sum as a one-hot bf16 matmul with f32 accumulation.
    #    Padded edges carry an out-of-range index sentinel -> all-zero column.
    onehot = (rows_ref[...] == idx_ref[...]).astype(jnp.bfloat16)
    acc_ref[...] += jnp.dot(onehot, edge, preferred_element_type=jnp.float32)


# --------------------------------------------------------------------------
# Pass 2: lin_up + num_layers x (Linear + SiLU), tiled over node rows.
# --------------------------------------------------------------------------
def mlp_kernel(nodes_ref, w_up_ref, w1_ref, b1_ref, w2_ref, b2_ref, o_ref):
    bf16 = jnp.bfloat16
    h = jnp.dot(nodes_ref[...].astype(bf16), w_up_ref[...],
                preferred_element_type=jnp.float32)
    h = _silu(jnp.dot(h.astype(bf16), w1_ref[...],
                      preferred_element_type=jnp.float32) + b1_ref[...])
    h = _silu(jnp.dot(h.astype(bf16), w2_ref[...],
                      preferred_element_type=jnp.float32) + b2_ref[...])
    o_ref[...] = h.astype(o_ref.dtype)


def output_pp_block(x, rbf, idx, num_nodes, params, *, n_tile=256, e_tile=512):
    """x: [E, H], rbf: [E, R], idx: [E] int32. Returns [num_nodes, out_emb]."""
    E, H = x.shape
    R = rbf.shape[1]
    C = params["w_up"].shape[1]
    f32, bf16 = jnp.float32, jnp.bfloat16

    # Lane-dense padded feature dims; sublane-padded radial dim.
    H_pad = _round_up(H, 128)
    C_pad = _round_up(C, 128)
    R_pad = _round_up(R, 8)

    # Edge tiling (pass 1) and node tiling (pass 2).
    e_tile = min(e_tile, _round_up(E, 128))
    E_pad = _round_up(E, e_tile)
    e_tiles = E_pad // e_tile

    n_tile = min(n_tile, _round_up(num_nodes, 8))
    N_pad = _round_up(num_nodes, n_tile)
    n_tiles = N_pad // n_tile

    # Pad inputs. x is streamed in bf16 (dominant HBM stream); padded edges
    # get zero features AND an out-of-range index sentinel (N_pad).
    x_p = jnp.zeros((E_pad, H_pad), bf16).at[:E, :H].set(x.astype(bf16))
    rbf_p = jnp.zeros((E_pad, R_pad), f32).at[:E, :R].set(rbf.astype(f32))
    idx_p = jnp.full((1, E_pad), N_pad, jnp.int32).at[0, :E].set(
        idx.astype(jnp.int32))

    w_rbf = jnp.zeros((R_pad, H_pad), f32).at[:R, :H].set(
        params["w_rbf"].astype(f32))
    # MLP-tail weights in bf16 (f32 accumulation in the MXU); biases f32.
    w_up = jnp.zeros((H_pad, C_pad), bf16).at[:H, :C].set(
        params["w_up"].astype(bf16))
    w1 = jnp.zeros((C_pad, C_pad), bf16).at[:C, :C].set(
        params["w1"].astype(bf16))
    w2 = jnp.zeros((C_pad, C_pad), bf16).at[:C, :C].set(
        params["w2"].astype(bf16))
    b1 = jnp.zeros((1, C_pad), f32).at[0, :C].set(params["b1"].astype(f32))
    b2 = jnp.zeros((1, C_pad), f32).at[0, :C].set(params["b2"].astype(f32))

    # ---------------- Pass 1: scatter ----------------
    scatter_flops = 2 * E_pad * R_pad * H_pad + 2 * N_pad * E_pad * H_pad
    scatter_bytes = (2 * E_pad * H_pad + 4 * E_pad * R_pad + 4 * E_pad
                     + 4 * R_pad * H_pad + 4 * N_pad * H_pad)

    nodes = pl.pallas_call(
        scatter_kernel,
        out_shape=jax.ShapeDtypeStruct((N_pad, H_pad), f32),
        grid_spec=pltpu.PrefetchScalarGridSpec(
            num_scalar_prefetch=0,
            grid=(e_tiles,),
            in_specs=[
                pl.BlockSpec((1, e_tile), lambda e: (0, e)),        # idx
                pl.BlockSpec((e_tile, R_pad), lambda e: (e, 0)),    # rbf
                pl.BlockSpec((e_tile, H_pad), lambda e: (e, 0)),    # x (bf16)
                pl.BlockSpec((R_pad, H_pad), lambda e: (0, 0)),     # w_rbf
            ],
            # Constant index_map -> resident f32 accumulator across the sweep.
            out_specs=pl.BlockSpec((N_pad, H_pad), lambda e: (0, 0)),
            scratch_shapes=[pltpu.VMEM((N_pad, e_tile), jnp.int32)],
        ),
        compiler_params=pltpu.CompilerParams(
            dimension_semantics=("arbitrary",),
            vmem_limit_bytes=40 * 1024 * 1024),
        cost_estimate=pl.CostEstimate(
            flops=scatter_flops, transcendentals=0,
            bytes_accessed=scatter_bytes),
    )(idx_p, rbf_p, x_p, w_rbf)

    # ---------------- Pass 2: MLP tail ----------------
    mlp_flops = 2 * N_pad * H_pad * C_pad + 2 * 2 * N_pad * C_pad * C_pad
    mlp_bytes = (4 * N_pad * H_pad + 4 * N_pad * C_pad
                 + 2 * (H_pad * C_pad + 2 * C_pad * C_pad) + 8 * C_pad)

    out = pl.pallas_call(
        mlp_kernel,
        out_shape=jax.ShapeDtypeStruct((N_pad, C_pad), f32),
        grid_spec=pltpu.PrefetchScalarGridSpec(
            num_scalar_prefetch=0,
            grid=(n_tiles,),
            in_specs=[
                pl.BlockSpec((n_tile, H_pad), lambda n: (n, 0)),    # nodes
                pl.BlockSpec((H_pad, C_pad), lambda n: (0, 0)),     # w_up
                pl.BlockSpec((C_pad, C_pad), lambda n: (0, 0)),     # w1
                pl.BlockSpec((1, C_pad), lambda n: (0, 0)),         # b1
                pl.BlockSpec((C_pad, C_pad), lambda n: (0, 0)),     # w2
                pl.BlockSpec((1, C_pad), lambda n: (0, 0)),         # b2
            ],
            out_specs=pl.BlockSpec((n_tile, C_pad), lambda n: (n, 0)),
        ),
        compiler_params=pltpu.CompilerParams(
            dimension_semantics=("parallel",),
            vmem_limit_bytes=40 * 1024 * 1024),
        cost_estimate=pl.CostEstimate(
            flops=mlp_flops, transcendentals=2 * N_pad * C_pad,
            bytes_accessed=mlp_bytes),
    )(nodes, w_up, w1, b1, w2, b2)

    # Strip node/channel padding. Output is [num_nodes, out_emb_channels];
    # the module's self.lin (out_channels) is not applied by forward().
    return out[:num_nodes, :C]


def reference(x, rbf, idx, num_nodes, params):
    edge = (rbf @ params["w_rbf"]) * x
    nodes = jax.ops.segment_sum(edge, idx, num_segments=num_nodes)
    h = nodes @ params["w_up"]
    h = _silu(h @ params["w1"] + params["b1"])
    h = _silu(h @ params["w2"] + params["b2"])
    return h


if __name__ == "__main__":
    # Small shapes consistent with the module (num_layers = 2).
    E = 300           # number of edges (pads to 3 edge tiles of 128)
    N = 20            # num_nodes      (pads to 3 node tiles of 8)
    R = 6             # num_radial
    H = 32            # hidden_channels
    C = 32            # out_emb_channels
    # out_channels / self.lin is unused by the given forward().

    key = jax.random.PRNGKey(0)
    ks = jax.random.split(key, 8)

    def glorot(k, shape):
        # deterministic stand-in for glorot_orthogonal (synthetic weights)
        limit = np.sqrt(6.0 / (shape[0] + shape[1]))
        return jax.random.uniform(k, shape, jnp.float32, -limit, limit)

    params = {
        "w_rbf": glorot(ks[0], (R, H)),   # lin_rbf.weight.T
        "w_up":  glorot(ks[1], (H, C)),   # lin_up.weight.T
        "w1":    glorot(ks[2], (C, C)),
        "b1":    jnp.zeros((C,), jnp.float32),
        "w2":    glorot(ks[3], (C, C)),
        "b2":    jnp.zeros((C,), jnp.float32),
    }

    x = jax.random.normal(ks[4], (E, H), jnp.float32)
    rbf = jax.random.normal(ks[5], (E, R), jnp.float32)
    idx = jax.random.randint(ks[6], (E,), 0, N, jnp.int32)

    # Small tiles here purely to exercise multi-tile edge streaming, the
    # resident-accumulator pattern, and the node-tiled MLP pass at toy sizes.
    out = output_pp_block(x, rbf, idx, N, params, n_tile=8, e_tile=128)
    out = jax.block_until_ready(out)

    ref = reference(x, rbf, idx, N, params)
    # bf16 edge stream + bf16 scatter/MLP matmuls (f32 accumulation)
    # -> relaxed tolerance.
    np.testing.assert_allclose(np.asarray(out), np.asarray(ref),
                               rtol=3e-2, atol=3e-2)

    print("KERNEL_OK")
</pallas_src>

<mosaic_0001>
module attributes {stable_mosaic.version = 11 : i64} {
  func.func @scatter_kernel(%arg0: i32, %arg1: memref<1x128xi32, #tpu.memory_space<vmem>>, %arg2: memref<128x8xf32, #tpu.memory_space<vmem>>, %arg3: memref<128x128xbf16, #tpu.memory_space<vmem>>, %arg4: memref<8x128xf32, #tpu.memory_space<vmem>>, %arg5: memref<24x128xf32, #tpu.memory_space<vmem>>, %arg6: memref<24x128xi32, #tpu.memory_space<vmem>>) attributes {dimension_semantics = [#tpu.dimension_semantics<arbitrary>], iteration_bounds = array<i64: 3>, scalar_prefetch = 0 : i64, scratch_operands = 1 : i64, tpu.core_type = #tpu.core_type<tc>, window_params = [{transform_indices = @transform_0, window_bounds = array<i64: 1, 128>}, {transform_indices = @transform_1, window_bounds = array<i64: 128, 8>}, {transform_indices = @transform_2, window_bounds = array<i64: 128, 128>}, {pipeline_mode = #tpu.pipeline_mode<synchronous>, transform_indices = @transform_3, window_bounds = array<i64: 8, 128>}, {pipeline_mode = #tpu.pipeline_mode<synchronous>, transform_indices = @transform_4, window_bounds = array<i64: 24, 128>}]} {
    %c0_i32 = arith.constant 0 : i32
    %0 = arith.cmpi eq, %arg0, %c0_i32 : i32
    %1 = arith.extui %0 : i1 to i32
    %c0_i32_0 = arith.constant 0 : i32
    %2 = arith.cmpi ne, %1, %c0_i32_0 : i32
    scf.if %2 {
      %cst_15 = arith.constant 0.000000e+00 : f32
      %21 = vector.broadcast %cst_15 : f32 to vector<24x128xf32>
      %c0_16 = arith.constant 0 : index
      %c0_17 = arith.constant 0 : index
      %22 = vector.load %arg5[%c0_16, %c0_17] : memref<24x128xf32, #tpu.memory_space<vmem>>, vector<24x128xf32>
      tpu.vector_store %arg5[%c0_16, %c0_17], %21 {strides = array<i32>} : memref<24x128xf32, #tpu.memory_space<vmem>>, vector<24x128xf32>,
      %23 = tpu.iota {dimensions = array<i32: 0>} : vector<24x128xi32>
      %c0_18 = arith.constant 0 : index
      %c0_19 = arith.constant 0 : index
      %24 = vector.load %arg6[%c0_18, %c0_19] : memref<24x128xi32, #tpu.memory_space<vmem>>, vector<24x128xi32>
      tpu.vector_store %arg6[%c0_18, %c0_19], %23 {strides = array<i32>} : memref<24x128xi32, #tpu.memory_space<vmem>>, vector<24x128xi32>,
    } else {
    }
    %c0 = arith.constant 0 : index
    %c0_1 = arith.constant 0 : index
    %3 = vector.load %arg2[%c0, %c0_1] : memref<128x8xf32, #tpu.memory_space<vmem>>, vector<128x8xf32>
    %c0_2 = arith.constant 0 : index
    %c0_3 = arith.constant 0 : index
    %4 = vector.load %arg4[%c0_2, %c0_3] : memref<8x128xf32, #tpu.memory_space<vmem>>, vector<8x128xf32>
    %cst = arith.constant dense<0.000000e+00> : vector<128x128xf32>
    %5 = tpu.matmul %3, %4, %cst {dimension_numbers = #tpu.dot_dimension_numbers<[1], [0], [0], [1], [0, 0, 1, 1], [], []>} : vector<128x8xf32>, vector<8x128xf32>, vector<128x128xf32> -> vector<128x128xf32>
    %c0_4 = arith.constant 0 : index
    %c0_5 = arith.constant 0 : index
    %6 = vector.load %arg3[%c0_4, %c0_5] : memref<128x128xbf16, #tpu.memory_space<vmem>>, vector<128x128xbf16>
    %7 = arith.extf %6 : vector<128x128xbf16> to vector<128x128xf32>
    %8 = arith.mulf %5, %7 : vector<128x128xf32>
    %9 = arith.truncf %8 : vector<128x128xf32> to vector<128x128xbf16>
    %c0_6 = arith.constant 0 : index
    %c0_7 = arith.constant 0 : index
    %10 = vector.load %arg6[%c0_6, %c0_7] : memref<24x128xi32, #tpu.memory_space<vmem>>, vector<24x128xi32>
    %c0_8 = arith.constant 0 : index
    %c0_9 = arith.constant 0 : index
    %11 = vector.load %arg1[%c0_8, %c0_9] : memref<1x128xi32, #tpu.memory_space<vmem>>, vector<1x128xi32>
    %12 = vector.broadcast %11 : vector<1x128xi32> to vector<24x128xi32>
    %13 = arith.cmpi eq, %10, %12 : vector<24x128xi32>
    %14 = arith.extui %13 : vector<24x128xi1> to vector<24x128xi32>
    %15 = arith.sitofp %14 : vector<24x128xi32> to vector<24x128xf32>
    %16 = arith.truncf %15 : vector<24x128xf32> to vector<24x128xbf16>
    %c0_10 = arith.constant 0 : index
    %c0_11 = arith.constant 0 : index
    %17 = vector.load %arg5[%c0_10, %c0_11] : memref<24x128xf32, #tpu.memory_space<vmem>>, vector<24x128xf32>
    %cst_12 = arith.constant dense<0.000000e+00> : vector<24x128xf32>
    %18 = tpu.matmul %16, %9, %cst_12 {dimension_numbers = #tpu.dot_dimension_numbers<[1], [0], [0], [1], [0, 0, 1, 1], [], []>} : vector<24x128xbf16>, vector<128x128xbf16>, vector<24x128xf32> -> vector<24x128xf32>
    %19 = arith.addf %17, %18 : vector<24x128xf32>
    %c0_13 = arith.constant 0 : index
    %c0_14 = arith.constant 0 : index
    %20 = vector.load %arg5[%c0_13, %c0_14] : memref<24x128xf32, #tpu.memory_space<vmem>>, vector<24x128xf32>
    tpu.vector_store %arg5[%c0_13, %c0_14], %19 {strides = array<i32>} : memref<24x128xf32, #tpu.memory_space<vmem>>, vector<24x128xf32>,
    return
  }
  func.func @transform_0(%arg0: i32) -> (i32, i32) {
    %c0_i32 = arith.constant 0 : i32
    %c0_i32_0 = arith.constant 0 : i32
    return %c0_i32, %arg0 : i32, i32
  }
  func.func @transform_1(%arg0: i32) -> (i32, i32) {
    %c0_i32 = arith.constant 0 : i32
    %c0_i32_0 = arith.constant 0 : i32
    return %arg0, %c0_i32 : i32, i32
  }
  func.func @transform_2(%arg0: i32) -> (i32, i32) {
    %c0_i32 = arith.constant 0 : i32
    %c0_i32_0 = arith.constant 0 : i32
    return %arg0, %c0_i32 : i32, i32
  }
  func.func @transform_3(%arg0: i32) -> (i32, i32) {
    %c0_i32 = arith.constant 0 : i32
    %c0_i32_0 = arith.constant 0 : i32
    %c0_i32_1 = arith.constant 0 : i32
    return %c0_i32, %c0_i32_0 : i32, i32
  }
  func.func @transform_4(%arg0: i32) -> (i32, i32) {
    %c0_i32 = arith.constant 0 : i32
    %c0_i32_0 = arith.constant 0 : i32
    %c0_i32_1 = arith.constant 0 : i32
    return %c0_i32, %c0_i32_0 : i32, i32
  }
}

</mosaic_0001>

<llo_original>
// kernel: tpu_custom_call.1
$region0: #{tpu_custom_call.1}
  #allocation0 [shape = 'u32[]', space=smem, size = 0x4, offset = 0x4, fixed_abs, tag = 'smem constant byte address 0x4 - core index']
  #allocation1 [shape = 'u32[144,128]{1,0:T(1,128)}', space=vmem, size = 0x12000, scoped, tag = 'internal scratch']
  #allocation2 [shape = 's32[24,128]{1,0:T(8,128)}', space=vmem, size = 0x3000, scoped, tag = 'scratch operand']
  %s0 = inlined_call_operand.vmem [shape: s32[1,384], index: 0, kind: input, shape index: {}]
  %s1 = inlined_call_operand.vmem [shape: f32[384,8], index: 1, kind: input, shape index: {}]
  %s2 = inlined_call_operand.vmem [shape: bf16[384,128], index: 2, kind: input, shape index: {}]
  %s3 = inlined_call_operand.vmem [shape: f32[8,128], index: 3, kind: input, shape index: {}]
  %s4 = inlined_call_operand.hbm [shape: f32[24,128], index: 4, kind: output, shape index: {}]
  %s5 = sld [smem:[#allocation0]]
  $region53: #{tpu_custom_call.1} parent=0
    _
  %s7 = ssub.s32 1, %s5
  %s8 = scalar_select 0, %s7, %s5
  $region1: #{tpu_custom_call.1} parent=0
    #allocation3 [shape = 'u8[12288]{0}', space=vmem, size = 0x3000, scoped, tag = 'output window, operand 0, single buffered']
    #allocation4 [shape = 's32[2]{0}', space=sflag, size = 0x8, scoped, tag = 'scoped memory for tpu_custom_call.1']
    %9 = vsyncpa [#allocation4], 0
    loop: start=0, step=1, limit=5
    $region2: #{tpu_custom_call.1} parent=1 // loop_pre_header
      _
    $region3: #{tpu_custom_call.1} parent=1 // loop_header
      %s11 = sphi 0, %s15
      %p12 = scmp.ge.s32.totalorder %s11, 5
      %s21 = sphi 0, %s23
      %s24 = sphi 0, %s21
      %s25 = sphi 0, %s24
      %s41 = sphi 0, %s25
      %s47 = sphi 0, %s49
      %s50 = sphi 0, %s47
      %s51 = sphi 0, %s50
      %s67 = sphi 0, %s51
      %s73 = sphi 0, %s75
      %s76 = sphi 0, %s73
      %s77 = sphi 0, %s76
      %s93 = sphi 0, %s77
      %s97 = sphi 0, %s97
      %s99 = sphi 0, %s97
      %s100 = sphi 0, %s99
      %s114 = sphi 0, %s100
      %s118 = sphi 0, %s118
      %s120 = sphi 0, %s118
      %s121 = sphi 0, %s120
      %s135 = sphi 0, %s121
    $region4: #{tpu_custom_call.1} parent=1 // loop_header_branch
      %14 = sbr.rel (%p12) target = $region8
    $region5: #{tpu_custom_call.1} parent=1 // loop_body
      %s16 = ssub.s32 %s11, 1
      %s17 = ssub.s32 %s11, 2
      %s18 = sadd.s32 %s11, 1
      %s19 = ssub.s32 %s11, %s18
      %p20 = scmp.eq.s32.totalorder %s19, 0
      %s22 = sadd.s32 %s21, 1
      %s23 = scalar_select %p20, %s21, %s22
      %p26 = pneg %p20
      %p27 = scmp.eq.s32.totalorder %s11, 2
      %p28 = por %p26, %p27
      %p29 = scmp.ne.s32.totalorder %s21, %s24
      %p30 = scmp.eq.s32.totalorder %s11, 0
      %p31 = por %p29, %p30
      %p32 = scmp.ne.s32.totalorder %s21, %s24
      %p33 = scmp.eq.s32.totalorder %s16, 2
      %p34 = por %p32, %p33
      %p35 = scmp.ne.s32.totalorder %s24, %s25
      %p36 = scmp.eq.s32.totalorder %s16, 0
      %p37 = por %p35, %p36
      %p38 = scmp.ne.s32.totalorder %s24, %s25
      %p39 = scmp.eq.s32.totalorder %s17, 2
      %p40 = por %p38, %p39
      %p42 = scmp.ne.s32.totalorder %s25, %s41
      %p43 = scmp.eq.s32.totalorder %s17, 0
      %p44 = por %p42, %p43
      %s45 = ssub.s32 %s11, %s18
      %p46 = scmp.eq.s32.totalorder %s45, 0
      %s48 = sadd.s32 %s47, 1
      %s49 = scalar_select %p46, %s47, %s48
      %p52 = pneg %p46
      %p53 = scmp.eq.s32.totalorder %s11, 2
      %p54 = por %p52, %p53
      %p55 = scmp.ne.s32.totalorder %s47, %s50
      %p56 = scmp.eq.s32.totalorder %s11, 0
      %p57 = por %p55, %p56
      %p58 = scmp.ne.s32.totalorder %s47, %s50
      %p59 = scmp.eq.s32.totalorder %s16, 2
      %p60 = por %p58, %p59
      %p61 = scmp.ne.s32.totalorder %s50, %s51
      %p62 = scmp.eq.s32.totalorder %s16, 0
      %p63 = por %p61, %p62
      %p64 = scmp.ne.s32.totalorder %s50, %s51
      %p65 = scmp.eq.s32.totalorder %s17, 2
      %p66 = por %p64, %p65
      %p68 = scmp.ne.s32.totalorder %s51, %s67
      %p69 = scmp.eq.s32.totalorder %s17, 0
      %p70 = por %p68, %p69
      %s71 = ssub.s32 %s11, %s18
      %p72 = scmp.eq.s32.totalorder %s71, 0
      %s74 = sadd.s32 %s73, 1
      %s75 = scalar_select %p72, %s73, %s74
      %p78 = pneg %p72
      %p79 = scmp.eq.s32.totalorder %s11, 2
      %p80 = por %p78, %p79
      %p81 = scmp.ne.s32.totalorder %s73, %s76
      %p82 = scmp.eq.s32.totalorder %s11, 0
      %p83 = por %p81, %p82
      %p84 = scmp.ne.s32.totalorder %s73, %s76
      %p85 = scmp.eq.s32.totalorder %s16, 2
      %p86 = por %p84, %p85
      %p87 = scmp.ne.s32.totalorder %s76, %s77
      %p88 = scmp.eq.s32.totalorder %s16, 0
      %p89 = por %p87, %p88
      %p90 = scmp.ne.s32.totalorder %s76, %s77
      %p91 = scmp.eq.s32.totalorder %s17, 2
      %p92 = por %p90, %p91
      %p94 = scmp.ne.s32.totalorder %s77, %s93
      %p95 = scmp.eq.s32.totalorder %s17, 0
      %p96 = por %p94, %p95
      %s98 = sadd.s32 %s97, 1
      %p101 = scmp.eq.s32.totalorder %s11, 2
      %p102 = scmp.ne.s32.totalorder %s97, %s99
      %p103 = scmp.eq.s32.totalorder %s11, 0
      %p104 = por %p102, %p103
      %p105 = scmp.ne.s32.totalorder %s97, %s99
      %p106 = scmp.eq.s32.totalorder %s16, 2
      %p107 = por %p105, %p106
      %p108 = scmp.ne.s32.totalorder %s99, %s100
      %p109 = scmp.eq.s32.totalorder %s16, 0
      %p110 = por %p108, %p109
      %p111 = scmp.ne.s32.totalorder %s99, %s100
      %p112 = scmp.eq.s32.totalorder %s17, 2
      %p113 = por %p111, %p112
      %p115 = scmp.ne.s32.totalorder %s100, %s114
      %p116 = scmp.eq.s32.totalorder %s17, 0
      %p117 = por %p115, %p116
      %s119 = sadd.s32 %s118, 1
      %p122 = scmp.eq.s32.totalorder %s11, 2
      %p123 = scmp.ne.s32.totalorder %s118, %s120
      %p124 = scmp.eq.s32.totalorder %s11, 0
      %p125 = por %p123, %p124
      %p126 = scmp.ne.s32.totalorder %s118, %s120
      %p127 = scmp.eq.s32.totalorder %s16, 2
      %p128 = por %p126, %p127
      %p129 = scmp.ne.s32.totalorder %s120, %s121
      %p130 = scmp.eq.s32.totalorder %s16, 0
      %p131 = por %p129, %p130
      %p132 = scmp.ne.s32.totalorder %s120, %s121
      %p133 = scmp.eq.s32.totalorder %s17, 2
      %p134 = por %p132, %p133
      %p136 = scmp.ne.s32.totalorder %s121, %s135
      %p137 = scmp.eq.s32.totalorder %s17, 0
      %p138 = por %p136, %p137
      %p139 = scmp.le.s32.totalorder 1, %s11
      %p140 = scmp.lt.s32.totalorder %s11, 4
      %p141 = pnand %p139, %p140
      %p142 = pneg %p141
      // Predicated region
      $region9: #{tpu_custom_call.1} parent=5 // pred_check
        _
      $region10: #{tpu_custom_call.1} parent=5 // pred_check_branch
        %144 = sbr.rel (%p141) target = $region12
      $region11: #{tpu_custom_call.1} parent=5 // pred_region
        %s145 = ssub.s32 %s11, 1
        // Predicated region
        $region13: #{tpu_custom_call.1} parent=11 // pred_check
          %p146 = pneg %p110
        $region14: #{tpu_custom_call.1} parent=11 // pred_check_branch
          %148 = sbr.rel (%p146) target = $region16
        $region15: #{tpu_custom_call.1} parent=11 // pred_region
          _
        $region16: #{tpu_custom_call.1} parent=11 // pred_fallthru
          _
      $region12: #{tpu_custom_call.1} parent=5 // pred_fallthru
        _
      %p149 = scmp.lt.s32.totalorder %s11, 3
      // Predicated region
      $region17: #{tpu_custom_call.1} parent=5 // pred_check
        %p150 = pneg %p149
      $region18: #{tpu_custom_call.1} parent=5 // pred_check_branch
        %152 = sbr.rel (%p150) target = $region20
      $region19: #{tpu_custom_call.1} parent=5 // pred_region
        // Predicated region
        $region21: #{tpu_custom_call.1} parent=19 // pred_check
          %p153 = pneg %p31
        $region22: #{tpu_custom_call.1} parent=19 // pred_check_branch
          %155 = sbr.rel (%p153) target = $region24
        $region23: #{tpu_custom_call.1} parent=19 // pred_region
          %p156 = scmp.lt.s32.totalorder %s11, 2
          %s157 = scalar_select %p156, %s11, 2
          %s158 = scalar_lea.vmem %s0, %s157
        $region24: #{tpu_custom_call.1} parent=19 // pred_fallthru
          _
        // Predicated region
        $region25: #{tpu_custom_call.1} parent=19 // pred_check
          %p159 = pneg %p57
        $region26: #{tpu_custom_call.1} parent=19 // pred_check_branch
          %161 = sbr.rel (%p159) target = $region28
        $region27: #{tpu_custom_call.1} parent=19 // pred_region
          %s162 = smul.u32 16, %s11
          %p163 = scmp.lt.s32.totalorder %s162, 47
          %s164 = scalar_select %p163, %s162, 47
          %s165 = smul.addr %s164, 8
          %s166 = scalar_lea.vmem %s1, %s165
          %s167 = smul.u32 16, %s11
        $region28: #{tpu_custom_call.1} parent=19 // pred_fallthru
          _
        // Predicated region
        $region29: #{tpu_custom_call.1} parent=19 // pred_check
          %p168 = pneg %p83
        $region30: #{tpu_custom_call.1} parent=19 // pred_check_branch
          %170 = sbr.rel (%p168) target = $region32
        $region31: #{tpu_custom_call.1} parent=19 // pred_region
          %s171 = smul.u32 16, %s11
          %p172 = scmp.lt.s32.totalorder %s171, 47
          %s173 = scalar_select %p172, %s171, 47
          %s174 = smul.addr %s173, 4
          %s175 = scalar_lea.vmem %s2, %s174
          %s176 = smul.u32 16, %s11
        $region32: #{tpu_custom_call.1} parent=19 // pred_fallthru
          _
      $region20: #{tpu_custom_call.1} parent=5 // pred_fallthru
        _
      %p177 = scmp.le.s32.totalorder 1, %s11
      %p178 = scmp.lt.s32.totalorder %s11, 4
      %p179 = pnand %p177, %p178
      %p180 = pneg %p179
      // Predicated region
      $region33: #{tpu_custom_call.1} parent=5 // pred_check
        _
      $region34: #{tpu_custom_call.1} parent=5 // pred_check_branch
        %182 = sbr.rel (%p179) target = $region36
      $region35: #{tpu_custom_call.1} parent=5 // pred_region
        %s183 = ssub.s32 %s11, 1
        %p184 = scmp.lt.s32.totalorder %s16, 2
        %s185 = scalar_select %p184, %s16, 2
        %s186 = scalar_lea.vmem %s0, %s185
        %p187 = pneg %p37
        %p188 = pneg %p34
        %s189 = smul.u32 16, %s16
        %p190 = scmp.lt.s32.totalorder %s189, 47
        %s191 = scalar_select %p190, %s189, 47
        %s192 = smul.addr %s191, 8
        %s193 = scalar_lea.vmem %s1, %s192
        %p194 = pneg %p63
        %p195 = pneg %p60
        %s196 = smul.u32 16, %s16
        %p197 = scmp.lt.s32.totalorder %s196, 47
        %s198 = scalar_select %p197, %s196, 47
        %s199 = smul.addr %s198, 4
        %s200 = scalar_lea.vmem %s2, %s199
        %p201 = pneg %p89
        %p202 = pneg %p86
        %p203 = pneg %p110
        %p204 = pneg %p107
        %p205 = pneg %p131
        %p206 = pneg %p128
        %p207 = scmp.lt.s32.totalorder %s16, 2
        %s208 = scalar_select %p207, %s16, 2
        %s209 = scalar_lea.vmem %s0, %s208
        %s210 = smul.u32 16, %s16
        %p211 = scmp.lt.s32.totalorder %s210, 47
        %s212 = scalar_select %p211, %s210, 47
        %s213 = smul.addr %s212, 8
        %s214 = scalar_lea.vmem %s1, %s213
        %s215 = smul.u32 16, %s16
        %s216 = smul.u32 16, %s16
        %p217 = scmp.lt.s32.totalorder %s216, 47
        %s218 = scalar_select %p217, %s216, 47
        %s219 = smul.addr %s218, 4
        %s220 = scalar_lea.vmem %s2, %s219
        %s221 = smul.u32 16, %s16
        %p223 = scmp.eq.s32.totalorder %s16, 0
        // Predicated region
        $region37: #{tpu_custom_call.1} parent=35 // pred_check
          %p224 = pneg %p223
        $region38: #{tpu_custom_call.1} parent=35 // pred_check_branch
          %226 = sbr.rel (%p224) target = $region40
        $region39: #{tpu_custom_call.1} parent=35 // pred_region
          %227 = vst [vmem:[#allocation3] sm:$0xff] 0.0
          %228 = vst [vmem:[#allocation3 + $0x8] sm:$0xff] 0.0
          %229 = vst [vmem:[#allocation3 + $0x10] sm:$0xff] 0.0
          %v230 = vlaneseq
          %v231 = vshrl.u32 %v230, 7
          %v232 = vadd.s32 %v231, 8
          %v233 = vadd.s32 %v231, 16
          %234 = vst [vmem:[#allocation2] sm:$0xff] %v231
          %235 = vst [vmem:[#allocation2 + $0x8] sm:$0xff] %v232
          %236 = vst [vmem:[#allocation2 + $0x10] sm:$0xff] %v233
        $region40: #{tpu_custom_call.1} parent=35 // pred_fallthru
          _
        %v237 = vld [vmem:[%s214] sm:$0xff]
        %v238 = vld [vmem:[%s214 + $0x8] sm:$0xff]
        %v239 = vld [vmem:[%s214 + $0x10] sm:$0xff]
        %v240 = vld [vmem:[%s214 + $0x18] sm:$0xff]
        %v241 = vld [vmem:[%s214 + $0x20] sm:$0xff]
        %v242 = vld [vmem:[%s214 + $0x28] sm:$0xff]
        %v243 = vld [vmem:[%s214 + $0x30] sm:$0xff]
        %v244 = vld [vmem:[%s214 + $0x38] sm:$0xff]
        %v245 = vld [vmem:[%s214 + $0x40] sm:$0xff]
        %v246 = vld [vmem:[%s214 + $0x48] sm:$0xff]
        %v247 = vld [vmem:[%s214 + $0x50] sm:$0xff]
        %v248 = vld [vmem:[%s214 + $0x58] sm:$0xff]
        %v249 = vld [vmem:[%s214 + $0x60] sm:$0xff]
        %v250 = vld [vmem:[%s214 + $0x68] sm:$0xff]
        %v251 = vld [vmem:[%s214 + $0x70] sm:$0xff]
        %v252 = vld [vmem:[%s214 + $0x78] sm:$0xff]
        %v253 = vld [vmem:[%s3] sm:$0xff]
        %vm254 = vcmask 64512
        %v256 = vsel %vm254, %v237, 0
        %v259 = vsel %vm254, %v238, 0
        %v262 = vsel %vm254, %v239, 0
        %v265 = vsel %vm254, %v240, 0
        %v268 = vsel %vm254, %v241, 0
        %v271 = vsel %vm254, %v242, 0
        %v274 = vsel %vm254, %v243, 0
        %v277 = vsel %vm254, %v244, 0
        %v280 = vsel %vm254, %v245, 0
        %v283 = vsel %vm254, %v246, 0
        %v286 = vsel %vm254, %v247, 0
        %v289 = vsel %vm254, %v248, 0
        %v292 = vsel %vm254, %v249, 0
        %v295 = vsel %vm254, %v250, 0
        %v298 = vsel %vm254, %v251, 0
        %v301 = vsel %vm254, %v252, 0
        %303 = vmatprep.subr.mxu0 0.0
        %304 = vmatpush1.msra.mxu0 %v253
        %305 = vmatprep.subr.mxu0 0.0
        %306 = vmatpush1.msra.mxu0 0.0
        %307 = vmatprep.subr.mxu0 0.0
        %308 = vmatpush1.msra.mxu0 0.0
        %309 = vmatprep.subr.mxu0 0.0
        %310 = vmatpush1.msra.mxu0 0.0
        %311 = vmatprep.subr.mxu0 0.0
        %312 = vmatpush1.msra.mxu0 0.0
        %313 = vmatprep.subr.mxu0 0.0
        %314 = vmatpush1.msra.mxu0 0.0
        %315 = vmatprep.subr.mxu0 0.0
        %316 = vmatpush1.msra.mxu0 0.0
        %317 = vmatprep.subr.mxu0 0.0
        %318 = vmatpush1.msra.mxu0 0.0
        %319 = vmatprep.subr.mxu0 0.0
        %320 = vmatpush1.msra.mxu0 0.0
        %321 = vmatprep.subr.mxu0 0.0
        %322 = vmatpush1.msra.mxu0 0.0
        %323 = vmatprep.subr.mxu0 0.0
        %324 = vmatpush1.msra.mxu0 0.0
        %325 = vmatprep.subr.mxu0 0.0
        %326 = vmatpush1.msra.mxu0 0.0
        %327 = vmatprep.subr.mxu0 0.0
        %328 = vmatpush1.msra.mxu0 0.0
        %329 = vmatprep.subr.mxu0 0.0
        %330 = vmatpush1.msra.mxu0 0.0
        %331 = vmatprep.subr.mxu0 0.0
        %332 = vmatpush1.msra.mxu0 0.0
        %333 = vmatprep.subr.mxu0 0.0
        %334 = vmatpush1.msra.mxu0 0.0
        %335 = vmatprep.subr.mxu0 0.0
        %336 = vmatpush1.msra.mxu0 0.0
        %337 = vmatprep.subr.mxu0 0.0
        %338 = vmatpush1.msra.mxu0 0.0
        %339 = vmatprep.subr.mxu0 0.0
        %340 = vmatpush1.msra.mxu0 0.0
        %341 = vmatprep.subr.mxu0 0.0
        %342 = vmatpush1.msra.mxu0 0.0
        %343 = vmatprep.subr.mxu0 0.0
        %344 = vmatpush1.msra.mxu0 0.0
        %345 = vmatprep.subr.mxu0 0.0
        %346 = vmatpush1.msra.mxu0 0.0
        %347 = vmatprep.subr.mxu0 0.0
        %348 = vmatpush1.msra.mxu0 0.0
        %349 = vmatprep.subr.mxu0 0.0
        %350 = vmatpush1.msra.mxu0 0.0
        %351 = vmatprep.subr.mxu0 0.0
        %352 = vmatpush1.msra.mxu0 0.0
        %353 = vmatprep.subr.mxu0 0.0
        %354 = vmatpush1.msra.mxu0 0.0
        %355 = vmatprep.subr.mxu0 0.0
        %356 = vmatpush1.msra.mxu0 0.0
        %357 = vmatprep.subr.mxu0 0.0
        %358 = vmatpush1.msra.mxu0 0.0
        %359 = vmatprep.subr.mxu0 0.0
        %360 = vmatpush1.msra.mxu0 0.0
        %361 = vmatprep.subr.mxu0 0.0
        %362 = vmatpush1.msra.mxu0 0.0
        %363 = vmatprep.subr.mxu0 0.0
        %364 = vmatpush1.msra.mxu0 0.0
        %365 = vmatprep.subr.mxu0 0.0
        %366 = vmatpush1.msra.mxu0 0.0
        %367 = vmatprep.mubr.f32.mxu0 0.0
        %368 = vmatmul.mubr.f32.gmra.mrb[0].mxu0 %v256
        %v369 = vpop.f32.mrb[0].mxu0
        %v370 = vadd.f32 0.0, %v369
        %v371 = vpop.f32.mrb[0].mxu0
        %372 = vmatprep.mubr.f32.mxu0 0.0
        %373 = vmatmul.mubr.f32.gmra.mrb[0].mxu0 %v259
        %v374 = vpop.f32.mrb[0].mxu0
        %v375 = vadd.f32 0.0, %v374
        %v376 = vpop.f32.mrb[0].mxu0
        %377 = vmatprep.mubr.f32.mxu0 0.0
        %378 = vmatmul.mubr.f32.gmra.mrb[0].mxu0 %v262
        %v379 = vpop.f32.mrb[0].mxu0
        %v380 = vadd.f32 0.0, %v379
        %v381 = vpop.f32.mrb[0].mxu0
        %382 = vmatprep.mubr.f32.mxu0 0.0
        %383 = vmatmul.mubr.f32.gmra.mrb[0].mxu0 %v265
        %v384 = vpop.f32.mrb[0].mxu0
        %v385 = vadd.f32 0.0, %v384
        %v386 = vpop.f32.mrb[0].mxu0
        %387 = vmatprep.mubr.f32.mxu0 0.0
        %388 = vmatmul.mubr.f32.gmra.mrb[0].mxu0 %v268
        %v389 = vpop.f32.mrb[0].mxu0
        %v390 = vadd.f32 0.0, %v389
        %v391 = vpop.f32.mrb[0].mxu0
        %392 = vmatprep.mubr.f32.mxu0 0.0
        %393 = vmatmul.mubr.f32.gmra.mrb[0].mxu0 %v271
        %v394 = vpop.f32.mrb[0].mxu0
        %v395 = vadd.f32 0.0, %v394
        %v396 = vpop.f32.mrb[0].mxu0
        %397 = vmatprep.mubr.f32.mxu0 0.0
        %398 = vmatmul.mubr.f32.gmra.mrb[0].mxu0 %v274
        %v399 = vpop.f32.mrb[0].mxu0
        %v400 = vadd.f32 0.0, %v399
        %v401 = vpop.f32.mrb[0].mxu0
        %402 = vmatprep.mubr.f32.mxu0 0.0
        %403 = vmatmul.mubr.f32.gmra.mrb[0].mxu0 %v277
        %v404 = vpop.f32.mrb[0].mxu0
        %v405 = vadd.f32 0.0, %v404
        %v406 = vpop.f32.mrb[0].mxu0
        %407 = vmatprep.mubr.f32.mxu0 0.0
        %408 = vmatmul.mubr.f32.gmra.mrb[0].mxu0 %v280
        %v409 = vpop.f32.mrb[0].mxu0
        %v410 = vadd.f32 0.0, %v409
        %v411 = vpop.f32.mrb[0].mxu0
        %412 = vmatprep.mubr.f32.mxu0 0.0
        %413 = vmatmul.mubr.f32.gmra.mrb[0].mxu0 %v283
        %v414 = vpop.f32.mrb[0].mxu0
        %v415 = vadd.f32 0.0, %v414
        %v416 = vpop.f32.mrb[0].mxu0
        %417 = vmatprep.mubr.f32.mxu0 0.0
        %418 = vmatmul.mubr.f32.gmra.mrb[0].mxu0 %v286
        %v419 = vpop.f32.mrb[0].mxu0
        %v420 = vadd.f32 0.0, %v419
        %v421 = vpop.f32.mrb[0].mxu0
        %422 = vmatprep.mubr.f32.mxu0 0.0
        %423 = vmatmul.mubr.f32.gmra.mrb[0].mxu0 %v289
        %v424 = vpop.f32.mrb[0].mxu0
        %v425 = vadd.f32 0.0, %v424
        %v426 = vpop.f32.mrb[0].mxu0
        %427 = vmatprep.mubr.f32.mxu0 0.0
        %428 = vmatmul.mubr.f32.gmra.mrb[0].mxu0 %v292
        %v429 = vpop.f32.mrb[0].mxu0
        %v430 = vadd.f32 0.0, %v429
        %v431 = vpop.f32.mrb[0].mxu0
        %432 = vmatprep.mubr.f32.mxu0 0.0
        %433 = vmatmul.mubr.f32.gmra.mrb[0].mxu0 %v295
        %v434 = vpop.f32.mrb[0].mxu0
        %v435 = vadd.f32 0.0, %v434
        %v436 = vpop.f32.mrb[0].mxu0
        %437 = vmatprep.mubr.f32.mxu0 0.0
        %438 = vmatmul.mubr.f32.gmra.mrb[0].mxu0 %v298
        %v439 = vpop.f32.mrb[0].mxu0
        %v440 = vadd.f32 0.0, %v439
        %v441 = vpop.f32.mrb[0].mxu0
        %442 = vmatprep.mubr.f32.mxu0 0.0
        %443 = vmatmul.mubr.f32.gmra.mrb[0].mxu0 %v301
        %v444 = vpop.f32.mrb[0].mxu0
        %v445 = vadd.f32 0.0, %v444
        %v446 = vpop.f32.mrb[0].mxu0
        %447 = vdwg.mxu0
        %v448 = vld [vmem:[%s220] sm:$0xf]
        %v449 = vld [vmem:[%s220 + $0x4] sm:$0xf]
        %v450 = vld [vmem:[%s220 + $0x8] sm:$0xf]
        %v451 = vld [vmem:[%s220 + $0xc] sm:$0xf]
        %v452 = vld [vmem:[%s220 + $0x10] sm:$0xf]
        %v453 = vld [vmem:[%s220 + $0x14] sm:$0xf]
        %v454 = vld [vmem:[%s220 + $0x18] sm:$0xf]
        %v455 = vld [vmem:[%s220 + $0x1c] sm:$0xf]
        %v456 = vld [vmem:[%s220 + $0x20] sm:$0xf]
        %v457 = vld [vmem:[%s220 + $0x24] sm:$0xf]
        %v458 = vld [vmem:[%s220 + $0x28] sm:$0xf]
        %v459 = vld [vmem:[%s220 + $0x2c] sm:$0xf]
        %v460 = vld [vmem:[%s220 + $0x30] sm:$0xf]
        %v461 = vld [vmem:[%s220 + $0x34] sm:$0xf]
        %v462 = vld [vmem:[%s220 + $0x38] sm:$0xf]
        %v463 = vld [vmem:[%s220 + $0x3c] sm:$0xf]
        %v464 = vunpack.c.l.bf16 %v448
        %v465 = vunpack.c.l.bf16 %v449
        %v466 = vunpack.c.l.bf16 %v450
        %v467 = vunpack.c.l.bf16 %v451
        %v468 = vunpack.c.l.bf16 %v452
        %v469 = vunpack.c.l.bf16 %v453
        %v470 = vunpack.c.l.bf16 %v454
        %v471 = vunpack.c.l.bf16 %v455
        %v472 = vunpack.c.l.bf16 %v456
        %v473 = vunpack.c.l.bf16 %v457
        %v474 = vunpack.c.l.bf16 %v458
        %v475 = vunpack.c.l.bf16 %v459
        %v476 = vunpack.c.l.bf16 %v460
        %v477 = vunpack.c.l.bf16 %v461
        %v478 = vunpack.c.l.bf16 %v462
        %v479 = vunpack.c.l.bf16 %v463
        %v480 = vmul.f32 %v370, %v464
        %v481 = vmul.f32 %v375, %v465
        %v482 = vmul.f32 %v380, %v466
        %v483 = vmul.f32 %v385, %v467
        %v484 = vmul.f32 %v390, %v468
        %v485 = vmul.f32 %v395, %v469
        %v486 = vmul.f32 %v400, %v470
        %v487 = vmul.f32 %v405, %v471
        %v488 = vmul.f32 %v410, %v472
        %v489 = vmul.f32 %v415, %v473
        %v490 = vmul.f32 %v420, %v474
        %v491 = vmul.f32 %v425, %v475
        %v492 = vmul.f32 %v430, %v476
        %v493 = vmul.f32 %v435, %v477
        %v494 = vmul.f32 %v440, %v478
        %v495 = vmul.f32 %v445, %v479
        %v496 = vpack.c.bf16 %v481, %v480
        %v497 = vpack.c.bf16 %v483, %v482
        %v498 = vpack.c.bf16 %v485, %v484
        %v499 = vpack.c.bf16 %v487, %v486
        %v500 = vpack.c.bf16 %v489, %v488
        %v501 = vpack.c.bf16 %v491, %v490
        %v502 = vpack.c.bf16 %v493, %v492
        %v503 = vpack.c.bf16 %v495, %v494
        %v504 = vld [vmem:[#allocation2] sm:$0xff]
        %v505 = vld [vmem:[#allocation2 + $0x8] sm:$0xff]
        %v506 = vld [vmem:[#allocation2 + $0x10] sm:$0xff]
        %v507 = vld [vmem:[%s209] sm:$0x1]
        %v508 = vlaneseq
        %v509 = vshrl.u32 %v508, 7
        %v510 = vsub.s32 0, %v509
        %v511 = vrot.slane %v507, %v510
        %vm512 = vcmp.eq.s32.totalorder %v504, %v511
        %vm513 = vcmp.eq.s32.totalorder %v505, %v511
        %vm514 = vcmp.eq.s32.totalorder %v506, %v511
        %v515 = vsel %vm512, 1, 0
        %v516 = vsel %vm513, 1, 0
        %v517 = vsel %vm514, 1, 0
        %v518 = vcvt.s32.f32 %v515
        %v519 = vcvt.s32.f32 %v516
        %v520 = vcvt.s32.f32 %v517
        %v521 = vpack.c.bf16 %v519, %v518
        %v522 = vpack.c.bf16 %v520, %v520
        %v523 = vld [vmem:[#allocation3] sm:$0xff]
        %v524 = vld [vmem:[#allocation3 + $0x8] sm:$0xff]
        %v525 = vld [vmem:[#allocation3 + $0x10] sm:$0xff]
        %526 = vmatprep.subr.bf16.mxu0 0
        %527 = vmatpush1.bf16.msra.mxu0 %v496
        %528 = vmatprep.subr.bf16.mxu0 0
        %529 = vmatpush1.bf16.msra.mxu0 %v497
        %530 = vmatprep.subr.bf16.mxu0 0
        %531 = vmatpush1.bf16.msra.mxu0 %v498
        %532 = vmatprep.subr.bf16.mxu0 0
        %533 = vmatpush1.bf16.msra.mxu0 %v499
        %534 = vmatprep.subr.bf16.mxu0 0
        %535 = vmatpush1.bf16.msra.mxu0 %v500
        %536 = vmatprep.subr.bf16.mxu0 0
        %537 = vmatpush1.bf16.msra.mxu0 %v501
        %538 = vmatprep.subr.bf16.mxu0 0
        %539 = vmatpush1.bf16.msra.mxu0 %v502
        %540 = vmatprep.subr.bf16.mxu0 0
        %541 = vmatpush1.bf16.msra.mxu0 %v503
        %542 = vmatprep.subr.bf16.mxu0 0
        %543 = vmatpush1.bf16.msra.mxu0 0
        %544 = vmatprep.subr.bf16.mxu0 0
        %545 = vmatpush1.bf16.msra.mxu0 0
        %546 = vmatprep.subr.bf16.mxu0 0
        %547 = vmatpush1.bf16.msra.mxu0 0
        %548 = vmatprep.subr.bf16.mxu0 0
        %549 = vmatpush1.bf16.msra.mxu0 0
        %550 = vmatprep.subr.bf16.mxu0 0
        %551 = vmatpush1.bf16.msra.mxu0 0
        %552 = vmatprep.subr.bf16.mxu0 0
        %553 = vmatpush1.bf16.msra.mxu0 0
        %554 = vmatprep.subr.bf16.mxu0 0
        %555 = vmatpush1.bf16.msra.mxu0 0
        %556 = vmatprep.subr.bf16.mxu0 0
        %557 = vmatpush1.bf16.msra.mxu0 0
        %558 = vmatprep.mubr.bf16.mxu0 0
        %559 = vmatmul.mubr.bf16.gmra.mrb[0].mxu0 %v521
        %v560 = vpop.f32.mrb[0].mxu0
        %v561 = vadd.f32 0.0, %v560
        %v562 = vpop.f32.mrb[0].mxu0
        %v563 = vpop.f32.mrb[0].mxu0
        %v564 = vadd.f32 0.0, %v563
        %v565 = vpop.f32.mrb[0].mxu0
        %566 = vmatprep.mubr.bf16.mxu0 0
        %567 = vmatmul.mubr.bf16.gmra.mrb[0].mxu0 %v522
        %v568 = vpop.f32.mrb[0].mxu0
        %v569 = vadd.f32 0.0, %v568
        %v570 = vpop.f32.mrb[0].mxu0
        %v571 = vpop.f32.mrb[0].mxu0
        %v572 = vpop.f32.mrb[0].mxu0
        %573 = vdwg.mxu0
        %v574 = vadd.f32 %v523, %v561
        %v575 = vadd.f32 %v524, %v564
        %v576 = vadd.f32 %v525, %v569
        %577 = vst [vmem:[#allocation3] sm:$0xff] %v574
        %578 = vst [vmem:[#allocation3 + $0x8] sm:$0xff] %v575
        %579 = vst [vmem:[#allocation3 + $0x10] sm:$0xff] %v576
        // Predicated region
        $region41: #{tpu_custom_call.1} parent=35 // pred_check
          %p580 = pneg %p128
        $region42: #{tpu_custom_call.1} parent=35 // pred_check_branch
          %582 = sbr.rel (%p580) target = $region44
        $region43: #{tpu_custom_call.1} parent=35 // pred_region
          %s584 = ssub.s32 384, 384
          %585 = vsyncadd [#allocation4], %s584
          %s586 = sshll.u32 [#allocation3], 4
          %s587 = int_to_ptr.vmem [resolvable:$true] %s586
          %592 = dma.vmem_to_hbm [thread:$0]  %s587, 384, %s4, [#allocation4], 128, 128, 8
        $region44: #{tpu_custom_call.1} parent=35 // pred_fallthru
          _
        // Predicated region
        $region45: #{tpu_custom_call.1} parent=35 // pred_check
          %p593 = pneg %p128
        $region46: #{tpu_custom_call.1} parent=35 // pred_check_branch
          %595 = sbr.rel (%p593) target = $region48
        $region47: #{tpu_custom_call.1} parent=35 // pred_region
          %596 = dma.done [#allocation4], 384
        $region48: #{tpu_custom_call.1} parent=35 // pred_fallthru
          _
      $region36: #{tpu_custom_call.1} parent=5 // pred_fallthru
        _
      %p597 = scmp.le.s32.totalorder 2, %s11
      // Predicated region
      $region49: #{tpu_custom_call.1} parent=5 // pred_check
        %p598 = pneg %p597
      $region50: #{tpu_custom_call.1} parent=5 // pred_check_branch
        %600 = sbr.rel (%p598) target = $region52
      $region51: #{tpu_custom_call.1} parent=5 // pred_region
        %s601 = ssub.s32 %s11, 2
      $region52: #{tpu_custom_call.1} parent=5 // pred_fallthru
        _
    $region6: #{tpu_custom_call.1} parent=1 // loop_footer
      %s15 = sadd.s32 1, %s11
    $region7: #{tpu_custom_call.1} parent=1 // loop_footer_branch
      %10 = sbr.rel target = $region3
    $region8: #{tpu_custom_call.1} parent=1 // loop_exit
      _
    %602 = vsyncpa [#allocation4], 1
    %s603 = scalar_lea.sflag [#allocation4], 1
    %604 = vsyncpa %s603, 1

</llo_original>
